<compile_context>
chip_gen: v7x
topology: tpu7x:2x2x1
jax: 0.10.0
libtpu: 0.0.40
codegen_flags: <defaults>
</compile_context>

<pallas_src>
import functools

import jax
import jax.numpy as jnp
from jax import lax
from jax.experimental import pallas as pl
from jax.experimental.pallas import tpu as pltpu

LN_EPS = 1e-5
_INV_SQRT2 = 0.7071067811865476


def _gelu(x, approximate):
    if approximate:
        # tanh approximation -> EUP slot; slight deviation from nn.GELU().
        return jax.nn.gelu(x, approximate=True)
    return 0.5 * x * (1.0 + lax.erf(x * _INV_SQRT2))


def _layernorm(x, gamma, beta):
    mean = jnp.mean(x, axis=-1, keepdims=True)
    xc = x - mean
    var = jnp.mean(xc * xc, axis=-1, keepdims=True)
    return xc * lax.rsqrt(var + LN_EPS) * gamma + beta


# ---------------- pass 1: LN + full W1 + GELU, stash z_local, sum z_global ----------------

def _pass1_kernel(x_ref, lng_ref, lnb_ref, w1_ref, b1_ref,
                  zloc_ref, zsum_ref, *, half, tn, n_real, approximate_gelu):
    t = pl.program_id(1)

    @pl.when(t == 0)
    def _():
        zsum_ref[...] = jnp.zeros_like(zsum_ref)

    x = x_ref[0].astype(jnp.float32)                         # (TN, in_dim)
    xn = _layernorm(x, lng_ref[...], lnb_ref[...])

    # Full-width W1 matmul (all h columns -> full MXU occupancy on v6e/v7x).
    z = jnp.dot(xn.astype(jnp.bfloat16), w1_ref[...],
                preferred_element_type=jnp.float32) + b1_ref[...]
    z = _gelu(z, approximate_gelu)                           # (TN, h)

    # Stash z_local for pass 2 so it never re-reads x / re-runs LN + W1_local.
    zloc_ref[0] = z[:, :half].astype(zloc_ref.dtype)

    # Masked running sum of z_global (padded tokens must not pollute the mean).
    row = lax.broadcasted_iota(jnp.int32, (tn, 1), 0) + t * tn
    zg = jnp.where(row < n_real, z[:, half:], 0.0)
    zsum_ref[0] = zsum_ref[0] + jnp.sum(zg, axis=0, keepdims=True)


# ---------------- pass 2: per-token MLP tail on stashed z_local ----------------

def _pass2_kernel(gb_ref, zl_ref, w2t_ref, w3_ref, b3_ref, w4r_ref, out_ref,
                  *, approximate_gelu):
    zl = zl_ref[0]                                           # (TN, h/2) bf16

    # layer2 first Linear: z_local @ W2_top + (mean(z_global) @ W2_bot + b2)
    h1 = _gelu(
        jnp.dot(zl, w2t_ref[...], preferred_element_type=jnp.float32) + gb_ref[0],
        approximate_gelu)                                    # (TN, h/2)

    h2 = _gelu(
        jnp.dot(h1.astype(jnp.bfloat16), w3_ref[...],
                preferred_element_type=jnp.float32) + b3_ref[...],
        approximate_gelu)                                    # (TN, q_pad)

    # Final 1-wide projection on VPU + lane reduce; lane-dense store (no vst.msk).
    out_ref[0, 0] = jnp.sum(h2 * w4r_ref[...], axis=-1).astype(out_ref.dtype)


# --------------------------------- wrapper ---------------------------------

def _round_up(v, m):
    return (v + m - 1) // m * m


def _choose_tn(n, in_dim, half, max_tn=1024, vmem_budget=40 * 1024 * 1024):
    """Largest 128-multiple token tile <= max_tn whose double-buffered
    x / z_local / out tiles still fit comfortably in scoped VMEM."""
    tn = min(max_tn, _round_up(n, 128))
    per_tok = 2 * (in_dim * 4 + half * 2 + 4)   # 2 pipeline buffers each
    while tn > 128 and tn * per_tok > vmem_budget:
        tn -= 128
    return max(tn, 128)


def mask_predictor(x, params, *, h_dim, tn=None, approximate_gelu=False,
                   cast_x_bf16=False):
    """x: (B, N, in_dim).  params: dict of pre-transposed weights."""
    B, N, in_dim = x.shape
    assert h_dim % 4 == 0
    half, quarter = h_dim // 2, h_dim // 4
    q_pad = _round_up(quarter, 128)             # lane-full h/4 stage

    f32, bf16 = jnp.float32, jnp.bfloat16

    if tn is None:
        tn = _choose_tn(N, in_dim, half)
    assert tn % 128 == 0
    n_pad = _round_up(N, tn)
    nt = n_pad // tn

    if cast_x_bf16:
        # v5e option: halves x HBM read traffic; LN stats still f32 in-kernel.
        x = x.astype(bf16)
    if n_pad != N:
        x = jnp.pad(x, ((0, 0), (0, n_pad - N), (0, 0)))

    ln_g = params["ln_g"].astype(f32)
    ln_b = params["ln_b"].astype(f32)
    w1 = params["w1"].astype(bf16)                        # (in_dim, h)
    b1 = params["b1"].astype(f32)                         # (1, h)
    w2 = params["w2"]
    w2_top = w2[:half, :].astype(bf16)                    # multiplies z_local
    w2_bot = w2[half:, :].astype(bf16)                    # multiplies mean(z_global)
    b2 = params["b2"].astype(f32)                         # (1, h/2)
    w3 = jnp.pad(params["w3"], ((0, 0), (0, q_pad - quarter))).astype(bf16)
    b3 = jnp.pad(params["b3"], ((0, 0), (0, q_pad - quarter))).astype(f32)
    w4_row = jnp.pad(params["w4"].reshape(1, quarter),
                     ((0, 0), (0, q_pad - quarter))).astype(f32)
    b4 = params["b4"].astype(f32)                         # (1, 1)

    def full_spec(a):
        # TODO(synk): pipeline_mode=pl.Buffered(1) here would halve the weight VMEM
        # footprint on v7x for large h_dim (constant block index needs no double buffer).
        nd = a.ndim
        return pl.BlockSpec(a.shape, lambda b, t, _nd=nd: (0,) * _nd)

    cparams = dict(vmem_limit_bytes=48 * 1024 * 1024)     # safe under v7x's 64 MiB

    x_spec = pl.BlockSpec((1, tn, in_dim), lambda b, t: (b, t, 0))
    zl_spec = pl.BlockSpec((1, tn, half), lambda b, t: (b, t, 0))

    # ---- pass 1 ----
    pass1 = pl.pallas_call(
        functools.partial(_pass1_kernel, half=half, tn=tn, n_real=N,
                          approximate_gelu=approximate_gelu),
        out_shape=(jax.ShapeDtypeStruct((B, n_pad, half), bf16),      # z_local
                   jax.ShapeDtypeStruct((B, 1, half), f32)),          # sum of z_global
        grid_spec=pltpu.PrefetchScalarGridSpec(
            num_scalar_prefetch=0,
            grid=(B, nt),
            in_specs=[x_spec] + [full_spec(a) for a in (ln_g, ln_b, w1, b1)],
            out_specs=(zl_spec,
                       pl.BlockSpec((1, 1, half), lambda b, t: (b, 0, 0))),
        ),
        compiler_params=pltpu.CompilerParams(
            dimension_semantics=("parallel", "arbitrary"), **cparams),
    )
    # TODO(synk): v7x with B==1: add a chunk axis with per-chunk partial sums so
    # pass 1 is megacore-splittable beyond the batch axis.
    z_local, z_sum = pass1(x, ln_g, ln_b, w1, b1)

    # ---- tiny finalize in plain JAX: mean over N_real, then g @ W2_bot + b2 ----
    g = z_sum[:, 0, :] * (1.0 / N)                                    # (B, h/2)
    g_bias = (jnp.dot(g.astype(bf16), w2_bot, preferred_element_type=f32)
              + b2).reshape(B, 1, half)

    # ---- pass 2: per-token tail, lane-dense (B, 1, N_pad) output ----
    weights2 = (w2_top, w3, b3, w4_row)
    pass2 = pl.pallas_call(
        functools.partial(_pass2_kernel, approximate_gelu=approximate_gelu),
        out_shape=jax.ShapeDtypeStruct((B, 1, n_pad), f32),
        grid_spec=pltpu.PrefetchScalarGridSpec(
            num_scalar_prefetch=0,
            grid=(B, nt),
            in_specs=[pl.BlockSpec((1, 1, half), lambda b, t: (b, 0, 0)), zl_spec]
                     + [full_spec(a) for a in weights2],
            out_specs=pl.BlockSpec((1, 1, tn), lambda b, t: (b, 0, t)),
        ),
        compiler_params=pltpu.CompilerParams(
            dimension_semantics=("parallel", "parallel"), **cparams),
    )
    out = pass2(g_bias, z_local, *weights2)

    out = out + b4                          # final bias, trivial XLA elementwise
    return out[:, 0, :N].reshape(B, N, 1)   # drop pad tokens, restore (B, N, 1)


# ------------------- parameter init (deterministic, mirrors __init__) -------------------

def _xavier_uniform(key, fan_in, fan_out):
    bound = (6.0 / (fan_in + fan_out)) ** 0.5
    # torch Linear weight is (out, in); return pre-transposed (in, out).
    return jax.random.uniform(key, (fan_in, fan_out), jnp.float32, -bound, bound)


def init_params(key, in_dim, h_dim):
    k1, k2, k3, k4 = jax.random.split(key, 4)
    return {
        "ln_g": jnp.ones((1, in_dim), jnp.float32),
        "ln_b": jnp.zeros((1, in_dim), jnp.float32),
        "w1": _xavier_uniform(k1, in_dim, h_dim),
        "b1": jnp.zeros((1, h_dim), jnp.float32),
        "w2": _xavier_uniform(k2, h_dim, h_dim // 2),
        "b2": jnp.zeros((1, h_dim // 2), jnp.float32),
        "w3": _xavier_uniform(k3, h_dim // 2, h_dim // 4),
        "b3": jnp.zeros((1, h_dim // 4), jnp.float32),
        "w4": _xavier_uniform(k4, h_dim // 4, 1),
        "b4": jnp.zeros((1, 1), jnp.float32),
    }


# ------------------- pure-JAX references -------------------

def reference_f32(x, p, h_dim):
    """Exact f32 reference mirroring the PyTorch module structure."""
    mean = jnp.mean(x, axis=-1, keepdims=True)
    var = jnp.mean((x - mean) ** 2, axis=-1, keepdims=True)
    xn = (x - mean) / jnp.sqrt(var + LN_EPS) * p["ln_g"][0] + p["ln_b"][0]
    z = _gelu(xn @ p["w1"] + p["b1"][0], False)
    half = h_dim // 2
    z_local, z_global = z[..., :half], z[..., half:]
    g = jnp.mean(z_global, axis=1, keepdims=True)
    g = jnp.broadcast_to(g, z_local.shape)
    z2 = jnp.concatenate([z_local, g], axis=-1)
    h1 = _gelu(z2 @ p["w2"] + p["b2"][0], False)
    h2 = _gelu(h1 @ p["w3"] + p["b3"][0], False)
    return h2 @ p["w4"] + p["b4"][0]


def reference_bf16(x, p, h_dim):
    """Reference mimicking the kernel's bf16-matmul / f32-accumulate numerics."""
    bf16, f32 = jnp.bfloat16, jnp.float32
    half = h_dim // 2
    mean = jnp.mean(x, axis=-1, keepdims=True)
    var = jnp.mean((x - mean) ** 2, axis=-1, keepdims=True)
    xn = (x - mean) * lax.rsqrt(var + LN_EPS) * p["ln_g"][0] + p["ln_b"][0]
    z = _gelu(jnp.dot(xn.astype(bf16), p["w1"].astype(bf16),
                      preferred_element_type=f32) + p["b1"][0], False)
    zl = z[..., :half].astype(bf16)          # kernel stashes z_local as bf16
    zg = z[..., half:]
    g = jnp.sum(zg, axis=1, keepdims=True) / x.shape[1]
    gbias = jnp.dot(g.astype(bf16), p["w2"][half:, :].astype(bf16),
                    preferred_element_type=f32) + p["b2"][0]
    h1 = _gelu(jnp.dot(zl, p["w2"][:half, :].astype(bf16),
                       preferred_element_type=f32) + gbias, False)
    h2 = _gelu(jnp.dot(h1.astype(bf16), p["w3"].astype(bf16),
                       preferred_element_type=f32) + p["b3"][0], False)
    return jnp.sum(h2 * p["w4"].reshape(1, 1, -1), axis=-1, keepdims=True) + p["b4"][0]


if __name__ == "__main__":
    B, N, IN_DIM, H_DIM = 2, 8, 32, 32

    key = jax.random.PRNGKey(0)
    kx, kp = jax.random.split(key)
    x = jax.random.normal(kx, (B, N, IN_DIM), jnp.float32)
    params = init_params(kp, IN_DIM, H_DIM)

    out = mask_predictor(x, params, h_dim=H_DIM)
    out = jax.block_until_ready(out)
    assert out.shape == (B, N, 1), out.shape

    ref16 = reference_bf16(x, params, H_DIM)   # same bf16/f32 mixed precision
    ref32 = reference_f32(x, params, H_DIM)    # exact PyTorch-structured f32
    err16 = float(jnp.max(jnp.abs(out - ref16)))
    err32 = float(jnp.max(jnp.abs(out - ref32)))
    assert err16 < 2e-3, err16
    assert err32 < 1e-1, err32

    # Exercise the multi-tile + N-padding path (pad tokens masked out of the mean).
    N2 = 200
    x2 = jax.random.normal(jax.random.PRNGKey(1), (B, N2, IN_DIM), jnp.float32)
    out2 = jax.block_until_ready(mask_predictor(x2, params, h_dim=H_DIM, tn=128))
    assert out2.shape == (B, N2, 1), out2.shape
    err2 = float(jnp.max(jnp.abs(out2 - reference_bf16(x2, params, H_DIM))))
    assert err2 < 2e-3, err2

    print("KERNEL_OK")
</pallas_src>

<mosaic_0001>
module attributes {stable_mosaic.version = 11 : i64} {
  func.func @_pass1_kernel(%arg0: i32, %arg1: i32, %arg2: memref<1x128x32xf32, #tpu.memory_space<vmem>>, %arg3: memref<1x32xf32, #tpu.memory_space<vmem>>, %arg4: memref<1x32xf32, #tpu.memory_space<vmem>>, %arg5: memref<32x32xbf16, #tpu.memory_space<vmem>>, %arg6: memref<1x32xf32, #tpu.memory_space<vmem>>, %arg7: memref<1x128x16xbf16, #tpu.memory_space<vmem>>, %arg8: memref<1x1x16xf32, #tpu.memory_space<vmem>>) attributes {dimension_semantics = [#tpu.dimension_semantics<parallel>, #tpu.dimension_semantics<arbitrary>], iteration_bounds = array<i64: 2, 1>, scalar_prefetch = 0 : i64, scratch_operands = 0 : i64, tpu.core_type = #tpu.core_type<tc>, window_params = [{transform_indices = @transform_0, window_bounds = array<i64: 1, 128, 32>}, {pipeline_mode = #tpu.pipeline_mode<synchronous>, transform_indices = @transform_1, window_bounds = array<i64: 1, 32>}, {pipeline_mode = #tpu.pipeline_mode<synchronous>, transform_indices = @transform_2, window_bounds = array<i64: 1, 32>}, {pipeline_mode = #tpu.pipeline_mode<synchronous>, transform_indices = @transform_3, window_bounds = array<i64: 32, 32>}, {pipeline_mode = #tpu.pipeline_mode<synchronous>, transform_indices = @transform_4, window_bounds = array<i64: 1, 32>}, {transform_indices = @transform_5, window_bounds = array<i64: 1, 128, 16>}, {transform_indices = @transform_6, window_bounds = array<i64: 1, 1, 16>}]} {
    %c0_i32 = arith.constant 0 : i32
    %0 = arith.cmpi eq, %arg1, %c0_i32 : i32
    %1 = arith.extui %0 : i1 to i32
    %c0_i32_0 = arith.constant 0 : i32
    %2 = arith.cmpi ne, %1, %c0_i32_0 : i32
    scf.if %2 {
      %cst_30 = arith.constant 0.000000e+00 : f32
      %65 = vector.broadcast %cst_30 : f32 to vector<1x1x16xf32>
      %c0_31 = arith.constant 0 : index
      %c0_32 = arith.constant 0 : index
      %c0_33 = arith.constant 0 : index
      %66 = vector.load %arg8[%c0_31, %c0_32, %c0_33] : memref<1x1x16xf32, #tpu.memory_space<vmem>>, vector<1x1x16xf32>
      tpu.vector_store %arg8[%c0_31, %c0_32, %c0_33], %65 {strides = array<i32>} : memref<1x1x16xf32, #tpu.memory_space<vmem>>, vector<1x1x16xf32>,
    } else {
    }
    %c0 = arith.constant 0 : index
    %c0_1 = arith.constant 0 : index
    %c0_2 = arith.constant 0 : index
    %3 = vector.load %arg2[%c0, %c0_1, %c0_2] : memref<1x128x32xf32, #tpu.memory_space<vmem>>, vector<1x128x32xf32>
    %4 = vector.shape_cast %3 : vector<1x128x32xf32> to vector<128x32xf32>
    %c0_3 = arith.constant 0 : index
    %c0_4 = arith.constant 0 : index
    %5 = vector.load %arg3[%c0_3, %c0_4] : memref<1x32xf32, #tpu.memory_space<vmem>>, vector<1x32xf32>
    %c0_5 = arith.constant 0 : index
    %c0_6 = arith.constant 0 : index
    %6 = vector.load %arg4[%c0_5, %c0_6] : memref<1x32xf32, #tpu.memory_space<vmem>>, vector<1x32xf32>
    %cst = arith.constant dense<0.000000e+00> : vector<128xf32>
    %7 = vector.multi_reduction <add>, %4, %cst [1] : vector<128x32xf32> to vector<128xf32>
    %8 = vector.shape_cast %7 : vector<128xf32> to vector<128x1xf32>
    %cst_7 = arith.constant 3.200000e+01 : f32
    %9 = vector.broadcast %cst_7 : f32 to vector<128x1xf32>
    %10 = arith.divf %8, %9 : vector<128x1xf32>
    %11 = vector.broadcast %10 : vector<128x1xf32> to vector<128x32xf32>
    %12 = arith.subf %4, %11 : vector<128x32xf32>
    %13 = arith.mulf %12, %12 : vector<128x32xf32>
    %cst_8 = arith.constant dense<0.000000e+00> : vector<128xf32>
    %14 = vector.multi_reduction <add>, %13, %cst_8 [1] : vector<128x32xf32> to vector<128xf32>
    %15 = vector.shape_cast %14 : vector<128xf32> to vector<128x1xf32>
    %cst_9 = arith.constant 3.200000e+01 : f32
    %16 = vector.broadcast %cst_9 : f32 to vector<128x1xf32>
    %17 = arith.divf %15, %16 : vector<128x1xf32>
    %cst_10 = arith.constant 9.99999974E-6 : f32
    %18 = vector.broadcast %cst_10 : f32 to vector<128x1xf32>
    %19 = arith.addf %17, %18 : vector<128x1xf32>
    %20 = math.rsqrt %19 : vector<128x1xf32>
    %21 = vector.broadcast %20 : vector<128x1xf32> to vector<128x32xf32>
    %22 = arith.mulf %12, %21 : vector<128x32xf32>
    %23 = vector.broadcast %5 : vector<1x32xf32> to vector<128x32xf32>
    %24 = arith.mulf %22, %23 : vector<128x32xf32>
    %25 = vector.broadcast %6 : vector<1x32xf32> to vector<128x32xf32>
    %26 = arith.addf %24, %25 : vector<128x32xf32>
    %27 = arith.truncf %26 : vector<128x32xf32> to vector<128x32xbf16>
    %c0_11 = arith.constant 0 : index
    %c0_12 = arith.constant 0 : index
    %28 = vector.load %arg5[%c0_11, %c0_12] : memref<32x32xbf16, #tpu.memory_space<vmem>>, vector<32x32xbf16>
    %cst_13 = arith.constant dense<0.000000e+00> : vector<128x32xf32>
    %29 = tpu.matmul %27, %28, %cst_13 {dimension_numbers = #tpu.dot_dimension_numbers<[1], [0], [0], [1], [0, 0, 1, 1], [], []>} : vector<128x32xbf16>, vector<32x32xbf16>, vector<128x32xf32> -> vector<128x32xf32>
    %c0_14 = arith.constant 0 : index
    %c0_15 = arith.constant 0 : index
    %30 = vector.load %arg6[%c0_14, %c0_15] : memref<1x32xf32, #tpu.memory_space<vmem>>, vector<1x32xf32>
    %31 = vector.broadcast %30 : vector<1x32xf32> to vector<128x32xf32>
    %32 = arith.addf %29, %31 : vector<128x32xf32>
    %cst_16 = arith.constant 5.000000e-01 : f32
    %33 = vector.broadcast %cst_16 : f32 to vector<128x32xf32>
    %34 = arith.mulf %33, %32 : vector<128x32xf32>
    %cst_17 = arith.constant 0.707106769 : f32
    %35 = vector.broadcast %cst_17 : f32 to vector<128x32xf32>
    %36 = arith.mulf %32, %35 : vector<128x32xf32>
    %37 = math.erf %36 : vector<128x32xf32>
    %cst_18 = arith.constant 1.000000e+00 : f32
    %38 = vector.broadcast %cst_18 : f32 to vector<128x32xf32>
    %39 = arith.addf %38, %37 : vector<128x32xf32>
    %40 = arith.mulf %34, %39 : vector<128x32xf32>
    %41 = vector.extract_strided_slice %40 {offsets = [0, 0], sizes = [128, 16], strides = [1, 1]} : vector<128x32xf32> to vector<128x16xf32>
    %42 = arith.truncf %41 : vector<128x16xf32> to vector<128x16xbf16>
    %c0_19 = arith.constant 0 : index
    %c0_20 = arith.constant 0 : index
    %c0_21 = arith.constant 0 : index
    %43 = vector.load %arg7[%c0_19, %c0_20, %c0_21] : memref<1x128x16xbf16, #tpu.memory_space<vmem>>, vector<1x128x16xbf16>
    %44 = vector.shape_cast %43 : vector<1x128x16xbf16> to vector<128x16xbf16>
    %45 = vector.shape_cast %42 : vector<128x16xbf16> to vector<1x128x16xbf16>
    tpu.vector_store %arg7[%c0_19, %c0_20, %c0_21], %45 {strides = array<i32>} : memref<1x128x16xbf16, #tpu.memory_space<vmem>>, vector<1x128x16xbf16>,
    %46 = tpu.iota {dimensions = array<i32: 0>} : vector<128x1xi32>
    %c128_i32 = arith.constant 128 : i32
    %47 = arith.muli %arg1, %c128_i32 : i32
    %48 = vector.broadcast %47 : i32 to vector<128x1xi32>
    %49 = arith.addi %46, %48 : vector<128x1xi32>
    %c8_i32 = arith.constant 8 : i32
    %50 = vector.broadcast %c8_i32 : i32 to vector<128x1xi32>
    %51 = arith.cmpi slt, %49, %50 : vector<128x1xi32>
    %52 = vector.extract_strided_slice %40 {offsets = [0, 16], sizes = [128, 16], strides = [1, 1]} : vector<128x32xf32> to vector<128x16xf32>
    %cst_22 = arith.constant 0.000000e+00 : f32
    %53 = vector.shape_cast %51 : vector<128x1xi1> to vector<128x1xi1>
    %54 = vector.broadcast %53 : vector<128x1xi1> to vector<128x16xi1>
    %55 = vector.broadcast %cst_22 : f32 to vector<128x16xf32>
    %56 = arith.select %54, %52, %55 : vector<128x16xi1>, vector<128x16xf32>
    %c0_23 = arith.constant 0 : index
    %c0_24 = arith.constant 0 : index
    %c0_25 = arith.constant 0 : index
    %57 = vector.load %arg8[%c0_23, %c0_24, %c0_25] : memref<1x1x16xf32, #tpu.memory_space<vmem>>, vector<1x1x16xf32>
    %58 = vector.shape_cast %57 : vector<1x1x16xf32> to vector<1x16xf32>
    %cst_26 = arith.constant dense<0.000000e+00> : vector<16xf32>
    %59 = vector.multi_reduction <add>, %56, %cst_26 [0] : vector<128x16xf32> to vector<16xf32>
    %60 = vector.shape_cast %59 : vector<16xf32> to vector<1x16xf32>
    %61 = arith.addf %58, %60 : vector<1x16xf32>
    %c0_27 = arith.constant 0 : index
    %c0_28 = arith.constant 0 : index
    %c0_29 = arith.constant 0 : index
    %62 = vector.load %arg8[%c0_27, %c0_28, %c0_29] : memref<1x1x16xf32, #tpu.memory_space<vmem>>, vector<1x1x16xf32>
    %63 = vector.shape_cast %62 : vector<1x1x16xf32> to vector<1x16xf32>
    %64 = vector.shape_cast %61 : vector<1x16xf32> to vector<1x1x16xf32>
    tpu.vector_store %arg8[%c0_27, %c0_28, %c0_29], %64 {strides = array<i32>} : memref<1x1x16xf32, #tpu.memory_space<vmem>>, vector<1x1x16xf32>,
    return
  }
  func.func @transform_0(%arg0: i32, %arg1: i32) -> (i32, i32, i32) {
    %c0_i32 = arith.constant 0 : i32
    %c0_i32_0 = arith.constant 0 : i32
    return %arg0, %arg1, %c0_i32 : i32, i32, i32
  }
  func.func @transform_1(%arg0: i32, %arg1: i32) -> (i32, i32) {
    %c0_i32 = arith.constant 0 : i32
    %c0_i32_0 = arith.constant 0 : i32
    %c0_i32_1 = arith.constant 0 : i32
    return %c0_i32, %c0_i32_0 : i32, i32
  }
  func.func @transform_2(%arg0: i32, %arg1: i32) -> (i32, i32) {
    %c0_i32 = arith.constant 0 : i32
    %c0_i32_0 = arith.constant 0 : i32
    %c0_i32_1 = arith.constant 0 : i32
    return %c0_i32, %c0_i32_0 : i32, i32
  }
  func.func @transform_3(%arg0: i32, %arg1: i32) -> (i32, i32) {
    %c0_i32 = arith.constant 0 : i32
    %c0_i32_0 = arith.constant 0 : i32
    %c0_i32_1 = arith.constant 0 : i32
    return %c0_i32, %c0_i32_0 : i32, i32
  }
  func.func @transform_4(%arg0: i32, %arg1: i32) -> (i32, i32) {
    %c0_i32 = arith.constant 0 : i32
    %c0_i32_0 = arith.constant 0 : i32
    %c0_i32_1 = arith.constant 0 : i32
    return %c0_i32, %c0_i32_0 : i32, i32
  }
  func.func @transform_5(%arg0: i32, %arg1: i32) -> (i32, i32, i32) {
    %c0_i32 = arith.constant 0 : i32
    %c0_i32_0 = arith.constant 0 : i32
    return %arg0, %arg1, %c0_i32 : i32, i32, i32
  }
  func.func @transform_6(%arg0: i32, %arg1: i32) -> (i32, i32, i32) {
    %c0_i32 = arith.constant 0 : i32
    %c0_i32_0 = arith.constant 0 : i32
    %c0_i32_1 = arith.constant 0 : i32
    return %arg0, %c0_i32, %c0_i32_0 : i32, i32, i32
  }
}

</mosaic_0001>

<llo_original>
// kernel: tpu_custom_call.1
$region0: #{tpu_custom_call.1}
  #allocation0 [shape = 'u32[]', space=smem, size = 0x4, offset = 0x4, fixed_abs, tag = 'smem constant byte address 0x4 - core index']
  #allocation1 [shape = 'u32[144,128]{1,0:T(1,128)}', space=vmem, size = 0x12000, scoped, tag = 'internal scratch']
  %s0 = inlined_call_operand.vmem [shape: f32[2,128,32], index: 0, kind: input, shape index: {}]
  %s1 = inlined_call_operand.vmem [shape: f32[1,32], index: 1, kind: input, shape index: {}]
  %s2 = inlined_call_operand.vmem [shape: f32[1,32], index: 2, kind: input, shape index: {}]
  %s3 = inlined_call_operand.vmem [shape: bf16[32,32], index: 3, kind: input, shape index: {}]
  %s4 = inlined_call_operand.vmem [shape: f32[1,32], index: 4, kind: input, shape index: {}]
  %s5 = inlined_call_operand.vmem [shape: bf16[2,128,16], index: 5, kind: output, shape index: {0}]
  %s6 = inlined_call_operand.hbm [shape: f32[2,1,16], index: 6, kind: output, shape index: {1}]
  %7 = xla_tuple %s5, %s6
  %s8 = sld [smem:[#allocation0]]
  $region65: #{tpu_custom_call.1} parent=0
    _
  %s10 = ssub.s32 1, %s8
  %s11 = scalar_select 0, %s10, %s8
  $region1: #{tpu_custom_call.1} parent=0
    #allocation2 [shape = 'u8[1024]{0}', space=vmem, size = 0x400, scoped, tag = 'output window, operand 1']
    #allocation3 [shape = 's32[2]{0}', space=sflag, size = 0x8, scoped, tag = 'scoped memory for tpu_custom_call.1']
    %12 = vsyncpa [#allocation3], 0
    %s13 = scalar_lea.sflag [#allocation3], 1
    %14 = vsyncpa %s13, 0
    loop: start=0, step=1, limit=4
    $region2: #{tpu_custom_call.1} parent=1 // loop_pre_header
      _
    $region3: #{tpu_custom_call.1} parent=1 // loop_header
      %s16 = sphi 0, %s20
      %p17 = scmp.ge.s32.totalorder %s16, 4
      %s23 = sphi 0, %s35
      %s24 = sphi 0, %s31
      %s25 = sphi 0, %s23
      %s26 = sphi 0, %s24
      %s27 = sphi 0, %s25
      %s28 = sphi 0, %s26
      %s40 = sphi 0, %s42
      %s43 = sphi 0, %s40
      %s44 = sphi 0, %s43
      %s60 = sphi 0, %s44
      %s64 = sphi 0, %s64
      %s66 = sphi 0, %s64
      %s67 = sphi 0, %s66
      %s81 = sphi 0, %s67
      %s85 = sphi 0, %s85
      %s87 = sphi 0, %s85
      %s88 = sphi 0, %s87
      %s102 = sphi 0, %s88
      %s106 = sphi 0, %s106
      %s108 = sphi 0, %s106
      %s109 = sphi 0, %s108
      %s123 = sphi 0, %s109
      %s127 = sphi 0, %s127
      %s129 = sphi 0, %s127
      %s130 = sphi 0, %s129
      %s144 = sphi 0, %s130
      %s152 = sphi 0, %s154
      %s155 = sphi 0, %s152
      %s156 = sphi 0, %s155
      %s172 = sphi 0, %s156
      %s178 = sphi 0, %s180
      %s181 = sphi 0, %s178
      %s182 = sphi 0, %s181
      %s198 = sphi 0, %s182
    $region4: #{tpu_custom_call.1} parent=1 // loop_header_branch
      %19 = sbr.rel (%p17) target = $region8
    $region5: #{tpu_custom_call.1} parent=1 // loop_body
      %s21 = ssub.s32 %s16, 1
      %s22 = ssub.s32 %s16, 2
      %s29 = sadd.s32 1, %s24
      %p30 = scmp.ge.s32.totalorder %s29, 1
      %s31 = scalar_select %p30, 0, %s29
      %s32 = sadd.s32 1, %s23
      %s33 = scalar_select %p30, %s32, %s23
      %p34 = scmp.ge.s32.totalorder %s33, 2
      %s35 = scalar_select %p34, 0, %s33
      %s36 = ssub.s32 %s23, %s35
      %s37 = ssub.s32 %s24, %s31
      %s38 = sor.u32 %s36, %s37
      %p39 = scmp.eq.s32.totalorder %s38, 0
      %s41 = sadd.s32 %s40, 1
      %s42 = scalar_select %p39, %s40, %s41
      %p45 = pneg %p39
      %p46 = scmp.eq.s32.totalorder %s16, 1
      %p47 = por %p45, %p46
      %p48 = scmp.ne.s32.totalorder %s40, %s43
      %p49 = scmp.eq.s32.totalorder %s16, 0
      %p50 = por %p48, %p49
      %p51 = scmp.ne.s32.totalorder %s40, %s43
      %p52 = scmp.eq.s32.totalorder %s21, 1
      %p53 = por %p51, %p52
      %p54 = scmp.ne.s32.totalorder %s43, %s44
      %p55 = scmp.eq.s32.totalorder %s21, 0
      %p56 = por %p54, %p55
      %p57 = scmp.ne.s32.totalorder %s43, %s44
      %p58 = scmp.eq.s32.totalorder %s22, 1
      %p59 = por %p57, %p58
      %p61 = scmp.ne.s32.totalorder %s44, %s60
      %p62 = scmp.eq.s32.totalorder %s22, 0
      %p63 = por %p61, %p62
      %s65 = sadd.s32 %s64, 1
      %p68 = scmp.eq.s32.totalorder %s16, 1
      %p69 = scmp.ne.s32.totalorder %s64, %s66
      %p70 = scmp.eq.s32.totalorder %s16, 0
      %p71 = por %p69, %p70
      %p72 = scmp.ne.s32.totalorder %s64, %s66
      %p73 = scmp.eq.s32.totalorder %s21, 1
      %p74 = por %p72, %p73
      %p75 = scmp.ne.s32.totalorder %s66, %s67
      %p76 = scmp.eq.s32.totalorder %s21, 0
      %p77 = por %p75, %p76
      %p78 = scmp.ne.s32.totalorder %s66, %s67
      %p79 = scmp.eq.s32.totalorder %s22, 1
      %p80 = por %p78, %p79
      %p82 = scmp.ne.s32.totalorder %s67, %s81
      %p83 = scmp.eq.s32.totalorder %s22, 0
      %p84 = por %p82, %p83
      %s86 = sadd.s32 %s85, 1
      %p89 = scmp.eq.s32.totalorder %s16, 1
      %p90 = scmp.ne.s32.totalorder %s85, %s87
      %p91 = scmp.eq.s32.totalorder %s16, 0
      %p92 = por %p90, %p91
      %p93 = scmp.ne.s32.totalorder %s85, %s87
      %p94 = scmp.eq.s32.totalorder %s21, 1
      %p95 = por %p93, %p94
      %p96 = scmp.ne.s32.totalorder %s87, %s88
      %p97 = scmp.eq.s32.totalorder %s21, 0
      %p98 = por %p96, %p97
      %p99 = scmp.ne.s32.totalorder %s87, %s88
      %p100 = scmp.eq.s32.totalorder %s22, 1
      %p101 = por %p99, %p100
      %p103 = scmp.ne.s32.totalorder %s88, %s102
      %p104 = scmp.eq.s32.totalorder %s22, 0
      %p105 = por %p103, %p104
      %s107 = sadd.s32 %s106, 1
      %p110 = scmp.eq.s32.totalorder %s16, 1
      %p111 = scmp.ne.s32.totalorder %s106, %s108
      %p112 = scmp.eq.s32.totalorder %s16, 0
      %p113 = por %p111, %p112
      %p114 = scmp.ne.s32.totalorder %s106, %s108
      %p115 = scmp.eq.s32.totalorder %s21, 1
      %p116 = por %p114, %p115
      %p117 = scmp.ne.s32.totalorder %s108, %s109
      %p118 = scmp.eq.s32.totalorder %s21, 0
      %p119 = por %p117, %p118
      %p120 = scmp.ne.s32.totalorder %s108, %s109
      %p121 = scmp.eq.s32.totalorder %s22, 1
      %p122 = por %p120, %p121
      %p124 = scmp.ne.s32.totalorder %s109, %s123
      %p125 = scmp.eq.s32.totalorder %s22, 0
      %p126 = por %p124, %p125
      %s128 = sadd.s32 %s127, 1
      %p131 = scmp.eq.s32.totalorder %s16, 1
      %p132 = scmp.ne.s32.totalorder %s127, %s129
      %p133 = scmp.eq.s32.totalorder %s16, 0
      %p134 = por %p132, %p133
      %p135 = scmp.ne.s32.totalorder %s127, %s129
      %p136 = scmp.eq.s32.totalorder %s21, 1
      %p137 = por %p135, %p136
      %p138 = scmp.ne.s32.totalorder %s129, %s130
      %p139 = scmp.eq.s32.totalorder %s21, 0
      %p140 = por %p138, %p139
      %p141 = scmp.ne.s32.totalorder %s129, %s130
      %p142 = scmp.eq.s32.totalorder %s22, 1
      %p143 = por %p141, %p142
      %p145 = scmp.ne.s32.totalorder %s130, %s144
      %p146 = scmp.eq.s32.totalorder %s22, 0
      %p147 = por %p145, %p146
      %s148 = ssub.s32 %s23, %s35
      %s149 = ssub.s32 %s24, %s31
      %s150 = sor.u32 %s148, %s149
      %p151 = scmp.eq.s32.totalorder %s150, 0
      %s153 = sadd.s32 %s152, 1
      %s154 = scalar_select %p151, %s152, %s153
      %p157 = pneg %p151
      %p158 = scmp.eq.s32.totalorder %s16, 1
      %p159 = por %p157, %p158
      %p160 = scmp.ne.s32.totalorder %s152, %s155
      %p161 = scmp.eq.s32.totalorder %s16, 0
      %p162 = por %p160, %p161
      %p163 = scmp.ne.s32.totalorder %s152, %s155
      %p164 = scmp.eq.s32.totalorder %s21, 1
      %p165 = por %p163, %p164
      %p166 = scmp.ne.s32.totalorder %s155, %s156
      %p167 = scmp.eq.s32.totalorder %s21, 0
      %p168 = por %p166, %p167
      %p169 = scmp.ne.s32.totalorder %s155, %s156
      %p170 = scmp.eq.s32.totalorder %s22, 1
      %p171 = por %p169, %p170
      %p173 = scmp.ne.s32.totalorder %s156, %s172
      %p174 = scmp.eq.s32.totalorder %s22, 0
      %p175 = por %p173, %p174
      %s176 = ssub.s32 %s23, %s35
      %p177 = scmp.eq.s32.totalorder %s176, 0
      %s179 = sadd.s32 %s178, 1
      %s180 = scalar_select %p177, %s178, %s179
      %p183 = pneg %p177
      %p184 = scmp.eq.s32.totalorder %s16, 1
      %p185 = por %p183, %p184
      %p186 = scmp.ne.s32.totalorder %s178, %s181
      %p187 = scmp.eq.s32.totalorder %s16, 0
      %p188 = por %p186, %p187
      %p189 = scmp.ne.s32.totalorder %s178, %s181
      %p190 = scmp.eq.s32.totalorder %s21, 1
      %p191 = por %p189, %p190
      %p192 = scmp.ne.s32.totalorder %s181, %s182
      %p193 = scmp.eq.s32.totalorder %s21, 0
      %p194 = por %p192, %p193
      %p195 = scmp.ne.s32.totalorder %s181, %s182
      %p196 = scmp.eq.s32.totalorder %s22, 1
      %p197 = por %p195, %p196
      %p199 = scmp.ne.s32.totalorder %s182, %s198
      %p200 = scmp.eq.s32.totalorder %s22, 0
      %p201 = por %p199, %p200
      %p202 = scmp.le.s32.totalorder 1, %s16
      %p203 = scmp.lt.s32.totalorder %s16, 3
      %p204 = pnand %p202, %p203
      %p205 = pneg %p204
      // Predicated region
      $region9: #{tpu_custom_call.1} parent=5 // pred_check
        _
      $region10: #{tpu_custom_call.1} parent=5 // pred_check_branch
        %207 = sbr.rel (%p204) target = $region12
      $region11: #{tpu_custom_call.1} parent=5 // pred_region
        %s208 = ssub.s32 %s16, 1
        // Predicated region
        $region13: #{tpu_custom_call.1} parent=11 // pred_check
          %p209 = pneg %p77
        $region14: #{tpu_custom_call.1} parent=11 // pred_check_branch
          %211 = sbr.rel (%p209) target = $region16
        $region15: #{tpu_custom_call.1} parent=11 // pred_region
          _
        $region16: #{tpu_custom_call.1} parent=11 // pred_fallthru
          _
        // Predicated region
        $region17: #{tpu_custom_call.1} parent=11 // pred_check
          %p212 = pneg %p98
        $region18: #{tpu_custom_call.1} parent=11 // pred_check_branch
          %214 = sbr.rel (%p212) target = $region20
        $region19: #{tpu_custom_call.1} parent=11 // pred_region
          _
        $region20: #{tpu_custom_call.1} parent=11 // pred_fallthru
          _
        // Predicated region
        $region21: #{tpu_custom_call.1} parent=11 // pred_check
          %p215 = pneg %p119
        $region22: #{tpu_custom_call.1} parent=11 // pred_check_branch
          %217 = sbr.rel (%p215) target = $region24
        $region23: #{tpu_custom_call.1} parent=11 // pred_region
          _
        $region24: #{tpu_custom_call.1} parent=11 // pred_fallthru
          _
        // Predicated region
        $region25: #{tpu_custom_call.1} parent=11 // pred_check
          %p218 = pneg %p140
        $region26: #{tpu_custom_call.1} parent=11 // pred_check_branch
          %220 = sbr.rel (%p218) target = $region28
        $region27: #{tpu_custom_call.1} parent=11 // pred_region
          _
        $region28: #{tpu_custom_call.1} parent=11 // pred_fallthru
          _
      $region12: #{tpu_custom_call.1} parent=5 // pred_fallthru
        _
      %p221 = scmp.lt.s32.totalorder %s16, 2
      // Predicated region
      $region29: #{tpu_custom_call.1} parent=5 // pred_check
        %p222 = pneg %p221
      $region30: #{tpu_custom_call.1} parent=5 // pred_check_branch
        %224 = sbr.rel (%p222) target = $region32
      $region31: #{tpu_custom_call.1} parent=5 // pred_region
        // Predicated region
        $region33: #{tpu_custom_call.1} parent=31 // pred_check
          %p225 = pneg %p50
        $region34: #{tpu_custom_call.1} parent=31 // pred_check_branch
          %227 = sbr.rel (%p225) target = $region36
        $region35: #{tpu_custom_call.1} parent=31 // pred_region
          %s228 = smul.u32 16, %s24
          %p229 = scmp.lt.s32.totalorder %s23, 1
          %s230 = scalar_select %p229, %s23, 1
          %p231 = scmp.lt.s32.totalorder %s228, 15
          %s232 = scalar_select %p231, %s228, 15
          %s233 = smul.addr %s230, 16
          %s234 = sadd.s32 %s232, %s233
          %s235 = smul.addr %s234, 8
          %s236 = scalar_lea.vmem %s0, %s235
          %s237 = smul.u32 16, %s24
        $region36: #{tpu_custom_call.1} parent=31 // pred_fallthru
          _
      $region32: #{tpu_custom_call.1} parent=5 // pred_fallthru
        _
      %p238 = scmp.le.s32.totalorder 1, %s16
      %p239 = scmp.lt.s32.totalorder %s16, 3
      %p240 = pnand %p238, %p239
      %p241 = pneg %p240
      // Predicated region
      $region37: #{tpu_custom_call.1} parent=5 // pred_check
        _
      $region38: #{tpu_custom_call.1} parent=5 // pred_check_branch
        %243 = sbr.rel (%p240) target = $region40
      $region39: #{tpu_custom_call.1} parent=5 // pred_region
        %s244 = ssub.s32 %s16, 1
        %s245 = smul.u32 16, %s26
        %p246 = scmp.lt.s32.totalorder %s25, 1
        %s247 = scalar_select %p246, %s25, 1
        %p248 = scmp.lt.s32.totalorder %s245, 15
        %s249 = scalar_select %p248, %s245, 15
        %s250 = smul.addr %s247, 16
        %s251 = sadd.s32 %s249, %s250
        %s252 = smul.addr %s251, 8
        %s253 = scalar_lea.vmem %s0, %s252
        %p254 = pneg %p56
        %p255 = pneg %p53
        %p256 = pneg %p77
        %p257 = pneg %p74
        %p258 = pneg %p98
        %p259 = pneg %p95
        %p260 = pneg %p119
        %p261 = pneg %p116
        %p262 = pneg %p140
        %p263 = pneg %p137
        %p264 = pneg %p168
        %p265 = pneg %p165
        %s266 = smul.u32 16, %s26
        %p267 = scmp.lt.s32.totalorder %s25, 1
        %s268 = scalar_select %p267, %s25, 1
        %p269 = scmp.lt.s32.totalorder %s266, 15
        %s270 = scalar_select %p269, %s266, 15
        %s271 = smul.addr %s268, 16
        %s272 = sadd.s32 %s270, %s271
        %s273 = smul.addr %s272, 4
        %s274 = scalar_lea.vmem %s5, %s273
        %p275 = pneg %p194
        %p276 = pneg %p191
        %s277 = sand.u32 %s181, 1
        %s278 = scalar_lea.sflag [#allocation3], %s277
        %s279 = sand.u32 %s181, 1
        %s280 = scalar_lea.vmem [#allocation2], %s279
        %s281 = smul.u32 16, %s26
        %p282 = scmp.lt.s32.totalorder %s25, 1
        %s283 = scalar_select %p282, %s25, 1
        %p284 = scmp.lt.s32.totalorder %s281, 15
        %s285 = scalar_select %p284, %s281, 15
        %s286 = smul.addr %s283, 16
        %s287 = sadd.s32 %s285, %s286
        %s288 = smul.addr %s287, 8
        %s289 = scalar_lea.vmem %s0, %s288
        %s290 = smul.u32 16, %s26
        %s291 = smul.u32 16, %s26
        %p292 = scmp.lt.s32.totalorder %s25, 1
        %s293 = scalar_select %p292, %s25, 1
        %p294 = scmp.lt.s32.totalorder %s291, 15
        %s295 = scalar_select %p294, %s291, 15
        %s296 = smul.addr %s293, 16
        %s297 = sadd.s32 %s295, %s296
        %s298 = smul.addr %s297, 4
        %s299 = scalar_lea.vmem %s5, %s298
        %s300 = smul.u32 16, %s26
        %p302 = scmp.eq.s32.totalorder %s26, 0
        // Predicated region
        $region41: #{tpu_custom_call.1} parent=39 // pred_check
          %p303 = pneg %p302
        $region42: #{tpu_custom_call.1} parent=39 // pred_check_branch
          %305 = sbr.rel (%p303) target = $region44
        $region43: #{tpu_custom_call.1} parent=39 // pred_region
          %vm306 = vcmask 122880
          %307 = vst.msk [vmem:[%s280] sm:$0x1] %vm306, 0.0
        $region44: #{tpu_custom_call.1} parent=39 // pred_fallthru
          _
        %v308 = vld [vmem:[%s289] sm:$0xff]
        %v309 = vld [vmem:[%s289 + $0x8] sm:$0xff]
        %v310 = vld [vmem:[%s289 + $0x10] sm:$0xff]
        %v311 = vld [vmem:[%s289 + $0x18] sm:$0xff]
        %v312 = vld [vmem:[%s289 + $0x20] sm:$0xff]
        %v313 = vld [vmem:[%s289 + $0x28] sm:$0xff]
        %v314 = vld [vmem:[%s289 + $0x30] sm:$0xff]
        %v315 = vld [vmem:[%s289 + $0x38] sm:$0xff]
        %v316 = vld [vmem:[%s289 + $0x40] sm:$0xff]
        %v317 = vld [vmem:[%s289 + $0x48] sm:$0xff]
        %v318 = vld [vmem:[%s289 + $0x50] sm:$0xff]
        %v319 = vld [vmem:[%s289 + $0x58] sm:$0xff]
        %v320 = vld [vmem:[%s289 + $0x60] sm:$0xff]
        %v321 = vld [vmem:[%s289 + $0x68] sm:$0xff]
        %v322 = vld [vmem:[%s289 + $0x70] sm:$0xff]
        %v323 = vld [vmem:[%s289 + $0x78] sm:$0xff]
        %v324 = vld [vmem:[%s1] sm:$0x1]
        %v325 = vld [vmem:[%s2] sm:$0x1]
        %vm326 = vcmask 261120
        %v327 = vsel %vm326, %v308, 0.0
        %328 = vadd.xlane.f32.xlu0 %v327
        %v329 = vpop.xlane.xlu0 %328
        %v330 = vsel %vm326, %v309, 0.0
        %331 = vadd.xlane.f32.xlu0 %v330
        %v332 = vpop.xlane.xlu0 %331
        %v333 = vsel %vm326, %v310, 0.0
        %334 = vadd.xlane.f32.xlu0 %v333
        %v335 = vpop.xlane.xlu0 %334
        %v336 = vsel %vm326, %v311, 0.0
        %337 = vadd.xlane.f32.xlu0 %v336
        %v338 = vpop.xlane.xlu0 %337
        %v339 = vsel %vm326, %v312, 0.0
        %340 = vadd.xlane.f32.xlu0 %v339
        %v341 = vpop.xlane.xlu0 %340
        %v342 = vsel %vm326, %v313, 0.0
        %343 = vadd.xlane.f32.xlu0 %v342
        %v344 = vpop.xlane.xlu0 %343
        %v345 = vsel %vm326, %v314, 0.0
        %346 = vadd.xlane.f32.xlu0 %v345
        %v347 = vpop.xlane.xlu0 %346
        %v348 = vsel %vm326, %v315, 0.0
        %349 = vadd.xlane.f32.xlu0 %v348
        %v350 = vpop.xlane.xlu0 %349
        %v351 = vsel %vm326, %v316, 0.0
        %352 = vadd.xlane.f32.xlu0 %v351
        %v353 = vpop.xlane.xlu0 %352
        %v354 = vsel %vm326, %v317, 0.0
        %355 = vadd.xlane.f32.xlu0 %v354
        %v356 = vpop.xlane.xlu0 %355
        %v357 = vsel %vm326, %v318, 0.0
        %358 = vadd.xlane.f32.xlu0 %v357
        %v359 = vpop.xlane.xlu0 %358
        %v360 = vsel %vm326, %v319, 0.0
        %361 = vadd.xlane.f32.xlu0 %v360
        %v362 = vpop.xlane.xlu0 %361
        %v363 = vsel %vm326, %v320, 0.0
        %364 = vadd.xlane.f32.xlu0 %v363
        %v365 = vpop.xlane.xlu0 %364
        %v366 = vsel %vm326, %v321, 0.0
        %367 = vadd.xlane.f32.xlu0 %v366
        %v368 = vpop.xlane.xlu0 %367
        %v369 = vsel %vm326, %v322, 0.0
        %370 = vadd.xlane.f32.xlu0 %v369
        %v371 = vpop.xlane.xlu0 %370
        %v372 = vsel %vm326, %v323, 0.0
        %373 = vadd.xlane.f32.xlu0 %v372
        %v374 = vpop.xlane.xlu0 %373
        %v375 = vrcp.pop 32.0
        %v376 = vmul.f32 %v329, %v375
        %v377 = vmul.f32 %v332, %v375
        %v378 = vmul.f32 %v335, %v375
        %v379 = vmul.f32 %v338, %v375
        %v380 = vmul.f32 %v341, %v375
        %v381 = vmul.f32 %v344, %v375
        %v382 = vmul.f32 %v347, %v375
        %v383 = vmul.f32 %v350, %v375
        %v384 = vmul.f32 %v353, %v375
        %v385 = vmul.f32 %v356, %v375
        %v386 = vmul.f32 %v359, %v375
        %v387 = vmul.f32 %v362, %v375
        %v388 = vmul.f32 %v365, %v375
        %v389 = vmul.f32 %v368, %v375
        %v390 = vmul.f32 %v371, %v375
        %v391 = vmul.f32 %v374, %v375
        %v392 = vsub.f32 %v308, %v376
        %v393 = vsub.f32 %v309, %v377
        %v394 = vsub.f32 %v310, %v378
        %v395 = vsub.f32 %v311, %v379
        %v396 = vsub.f32 %v312, %v380
        %v397 = vsub.f32 %v313, %v381
        %v398 = vsub.f32 %v314, %v382
        %v399 = vsub.f32 %v315, %v383
        %v400 = vsub.f32 %v316, %v384
        %v401 = vsub.f32 %v317, %v385
        %v402 = vsub.f32 %v318, %v386
        %v403 = vsub.f32 %v319, %v387
        %v404 = vsub.f32 %v320, %v388
        %v405 = vsub.f32 %v321, %v389
        %v406 = vsub.f32 %v322, %v390
        %v407 = vsub.f32 %v323, %v391
        %v408 = vmul.f32 %v392, %v392
        %v409 = vmul.f32 %v393, %v393
        %v410 = vmul.f32 %v394, %v394
        %v411 = vmul.f32 %v395, %v395
        %v412 = vmul.f32 %v396, %v396
        %v413 = vmul.f32 %v397, %v397
        %v414 = vmul.f32 %v398, %v398
        %v415 = vmul.f32 %v399, %v399
        %v416 = vmul.f32 %v400, %v400
        %v417 = vmul.f32 %v401, %v401
        %v418 = vmul.f32 %v402, %v402
        %v419 = vmul.f32 %v403, %v403
        %v420 = vmul.f32 %v404, %v404
        %v421 = vmul.f32 %v405, %v405
        %v422 = vmul.f32 %v406, %v406
        %v423 = vmul.f32 %v407, %v407
        %v424 = vsel %vm326, %v408, 0.0
        %425 = vadd.xlane.f32.xlu0 %v424
        %v426 = vpop.xlane.xlu0 %425
        %v427 = vsel %vm326, %v409, 0.0
        %428 = vadd.xlane.f32.xlu0 %v427
        %v429 = vpop.xlane.xlu0 %428
        %v430 = vsel %vm326, %v410, 0.0
        %431 = vadd.xlane.f32.xlu0 %v430
        %v432 = vpop.xlane.xlu0 %431
        %v433 = vsel %vm326, %v411, 0.0
        %434 = vadd.xlane.f32.xlu0 %v433
        %v435 = vpop.xlane.xlu0 %434
        %v436 = vsel %vm326, %v412, 0.0
        %437 = vadd.xlane.f32.xlu0 %v436
        %v438 = vpop.xlane.xlu0 %437
        %v439 = vsel %vm326, %v413, 0.0
        %440 = vadd.xlane.f32.xlu0 %v439
        %v441 = vpop.xlane.xlu0 %440
        %v442 = vsel %vm326, %v414, 0.0
        %443 = vadd.xlane.f32.xlu0 %v442
        %v444 = vpop.xlane.xlu0 %443
        %v445 = vsel %vm326, %v415, 0.0
        %446 = vadd.xlane.f32.xlu0 %v445
        %v447 = vpop.xlane.xlu0 %446
        %v448 = vsel %vm326, %v416, 0.0
        %449 = vadd.xlane.f32.xlu0 %v448
        %v450 = vpop.xlane.xlu0 %449
        %v451 = vsel %vm326, %v417, 0.0
        %452 = vadd.xlane.f32.xlu0 %v451
        %v453 = vpop.xlane.xlu0 %452
        %v454 = vsel %vm326, %v418, 0.0
        %455 = vadd.xlane.f32.xlu0 %v454
        %v456 = vpop.xlane.xlu0 %455
        %v457 = vsel %vm326, %v419, 0.0
        %458 = vadd.xlane.f32.xlu0 %v457
        %v459 = vpop.xlane.xlu0 %458
        %v460 = vsel %vm326, %v420, 0.0
        %461 = vadd.xlane.f32.xlu0 %v460
        %v462 = vpop.xlane.xlu0 %461
        %v463 = vsel %vm326, %v421, 0.0
        %464 = vadd.xlane.f32.xlu0 %v463
        %v465 = vpop.xlane.xlu0 %464
        %v466 = vsel %vm326, %v422, 0.0
        %467 = vadd.xlane.f32.xlu0 %v466
        %v468 = vpop.xlane.xlu0 %467
        %v469 = vsel %vm326, %v423, 0.0
        %470 = vadd.xlane.f32.xlu0 %v469
        %v471 = vpop.xlane.xlu0 %470
        %v472 = vmul.f32 %v426, %v375
        %v473 = vmul.f32 %v429, %v375
        %v474 = vmul.f32 %v432, %v375
        %v475 = vmul.f32 %v435, %v375
        %v476 = vmul.f32 %v438, %v375
        %v477 = vmul.f32 %v441, %v375
        %v478 = vmul.f32 %v444, %v375
        %v479 = vmul.f32 %v447, %v375
        %v480 = vmul.f32 %v450, %v375
        %v481 = vmul.f32 %v453, %v375
        %v482 = vmul.f32 %v456, %v375
        %v483 = vmul.f32 %v459, %v375
        %v484 = vmul.f32 %v462, %v375
        %v485 = vmul.f32 %v465, %v375
        %v486 = vmul.f32 %v468, %v375
        %v487 = vmul.f32 %v471, %v375
        %v488 = vadd.f32 %v472, 1e-05
        %v489 = vadd.f32 %v473, 1e-05
        %v490 = vadd.f32 %v474, 1e-05
        %v491 = vadd.f32 %v475, 1e-05
        %v492 = vadd.f32 %v476, 1e-05
        %v493 = vadd.f32 %v477, 1e-05
        %v494 = vadd.f32 %v478, 1e-05
        %v495 = vadd.f32 %v479, 1e-05
        %v496 = vadd.f32 %v480, 1e-05
        %v497 = vadd.f32 %v481, 1e-05
        %v498 = vadd.f32 %v482, 1e-05
        %v499 = vadd.f32 %v483, 1e-05
        %v500 = vadd.f32 %v484, 1e-05
        %v501 = vadd.f32 %v485, 1e-05
        %v502 = vadd.f32 %v486, 1e-05
        %v503 = vadd.f32 %v487, 1e-05
        %v504 = vrsqrt.pop %v488
        %v505 = vrsqrt.pop %v489
        %v506 = vrsqrt.pop %v490
        %v507 = vrsqrt.pop %v491
        %v508 = vrsqrt.pop %v492
        %v509 = vrsqrt.pop %v493
        %v510 = vrsqrt.pop %v494
        %v511 = vrsqrt.pop %v495
        %v512 = vrsqrt.pop %v496
        %v513 = vrsqrt.pop %v497
        %v514 = vrsqrt.pop %v498
        %v515 = vrsqrt.pop %v499
        %v516 = vrsqrt.pop %v500
        %v517 = vrsqrt.pop %v501
        %v518 = vrsqrt.pop %v502
        %v519 = vrsqrt.pop %v503
        %v520 = vmul.f32 %v392, %v504
        %v521 = vmul.f32 %v393, %v505
        %v522 = vmul.f32 %v394, %v506
        %v523 = vmul.f32 %v395, %v507
        %v524 = vmul.f32 %v396, %v508
        %v525 = vmul.f32 %v397, %v509
        %v526 = vmul.f32 %v398, %v510
        %v527 = vmul.f32 %v399, %v511
        %v528 = vmul.f32 %v400, %v512
        %v529 = vmul.f32 %v401, %v513
        %v530 = vmul.f32 %v402, %v514
        %v531 = vmul.f32 %v403, %v515
        %v532 = vmul.f32 %v404, %v516
        %v533 = vmul.f32 %v405, %v517
        %v534 = vmul.f32 %v406, %v518
        %v535 = vmul.f32 %v407, %v519
        %v537 = vlaneseq
        %v538 = vshrl.u32 %v537, 7
        %v539 = vsub.s32 0, %v538
        %v540 = vrot.slane %v324, %v539
        %v542 = vmul.f32 %v520, %v540
        %v543 = vmul.f32 %v521, %v540
        %v544 = vmul.f32 %v522, %v540
        %v545 = vmul.f32 %v523, %v540
        %v546 = vmul.f32 %v524, %v540
        %v547 = vmul.f32 %v525, %v540
        %v548 = vmul.f32 %v526, %v540
        %v549 = vmul.f32 %v527, %v540
        %v550 = vmul.f32 %v528, %v540
        %v551 = vmul.f32 %v529, %v540
        %v552 = vmul.f32 %v530, %v540
        %v553 = vmul.f32 %v531, %v540
        %v554 = vmul.f32 %v532, %v540
        %v555 = vmul.f32 %v533, %v540
        %v556 = vmul.f32 %v534, %v540
        %v557 = vmul.f32 %v535, %v540
        %v559 = vlaneseq
        %v560 = vshrl.u32 %v559, 7
        %v561 = vsub.s32 0, %v560
        %v562 = vrot.slane %v325, %v561
        %v564 = vadd.f32 %v542, %v562
        %v565 = vadd.f32 %v543, %v562
        %v566 = vadd.f32 %v544, %v562
        %v567 = vadd.f32 %v545, %v562
        %v568 = vadd.f32 %v546, %v562
        %v569 = vadd.f32 %v547, %v562
        %v570 = vadd.f32 %v548, %v562
        %v571 = vadd.f32 %v549, %v562
        %v572 = vadd.f32 %v550, %v562
        %v573 = vadd.f32 %v551, %v562
        %v574 = vadd.f32 %v552, %v562
        %v575 = vadd.f32 %v553, %v562
        %v576 = vadd.f32 %v554, %v562
        %v577 = vadd.f32 %v555, %v562
        %v578 = vadd.f32 %v556, %v562
        %v579 = vadd.f32 %v557, %v562
        %v580 = vpack.c.bf16 %v565, %v564
        %v581 = vpack.c.bf16 %v567, %v566
        %v582 = vpack.c.bf16 %v569, %v568
        %v583 = vpack.c.bf16 %v571, %v570
        %v584 = vpack.c.bf16 %v573, %v572
        %v585 = vpack.c.bf16 %v575, %v574
        %v586 = vpack.c.bf16 %v577, %v576
        %v587 = vpack.c.bf16 %v579, %v578
        %v588 = vld [vmem:[%s3] sm:$0xf]
        %v589 = vld [vmem:[%s3 + $0x4] sm:$0xf]
        %v590 = vld [vmem:[%s3 + $0x8] sm:$0xf]
        %v591 = vld [vmem:[%s3 + $0xc] sm:$0xf]
        %v592 = vld [vmem:[%s4] sm:$0x1]
        %v594 = vlaneseq
        %v595 = vshrl.u32 %v594, 7
        %v596 = vsub.s32 0, %v595
        %v597 = vrot.slane %v592, %v596
        %v603 = vunpack.c.l.b16 %v588
        %v604 = vunpack.c.l.b16 %v589
        %v605 = vunpack.c.l.b16 %v590
        %v606 = vunpack.c.l.b16 %v591
        %v607 = vpack.c.b16 %v604, %v603
        %v608 = vpack.c.b16 %v606, %v605
        %v612 = vsel %vm326, %v580, 0
        %v615 = vsel %vm326, %v581, 0
        %v618 = vsel %vm326, %v582, 0
        %v621 = vsel %vm326, %v583, 0
        %v624 = vsel %vm326, %v584, 0
        %v627 = vsel %vm326, %v585, 0
        %v630 = vsel %vm326, %v586, 0
        %v633 = vsel %vm326, %v587, 0
        %635 = vmatprep.subr.bf16.mxu0 0
        %636 = vmatpush1.bf16.msra.mxu0 %v607
        %637 = vmatprep.subr.bf16.mxu0 0
        %638 = vmatpush1.bf16.msra.mxu0 %v608
        %639 = vmatprep.subr.bf16.mxu0 0
        %640 = vmatpush1.bf16.msra.mxu0 0
        %641 = vmatprep.subr.bf16.mxu0 0
        %642 = vmatpush1.bf16.msra.mxu0 0
        %643 = vmatprep.subr.bf16.mxu0 0
        %644 = vmatpush1.bf16.msra.mxu0 0
        %645 = vmatprep.subr.bf16.mxu0 0
        %646 = vmatpush1.bf16.msra.mxu0 0
        %647 = vmatprep.subr.bf16.mxu0 0
        %648 = vmatpush1.bf16.msra.mxu0 0
        %649 = vmatprep.subr.bf16.mxu0 0
        %650 = vmatpush1.bf16.msra.mxu0 0
        %651 = vmatprep.subr.bf16.mxu0 0
        %652 = vmatpush1.bf16.msra.mxu0 0
        %653 = vmatprep.subr.bf16.mxu0 0
        %654 = vmatpush1.bf16.msra.mxu0 0
        %655 = vmatprep.subr.bf16.mxu0 0
        %656 = vmatpush1.bf16.msra.mxu0 0
        %657 = vmatprep.subr.bf16.mxu0 0
        %658 = vmatpush1.bf16.msra.mxu0 0
        %659 = vmatprep.subr.bf16.mxu0 0
        %660 = vmatpush1.bf16.msra.mxu0 0
        %661 = vmatprep.subr.bf16.mxu0 0
        %662 = vmatpush1.bf16.msra.mxu0 0
        %663 = vmatprep.subr.bf16.mxu0 0
        %664 = vmatpush1.bf16.msra.mxu0 0
        %665 = vmatprep.subr.bf16.mxu0 0
        %666 = vmatpush1.bf16.msra.mxu0 0
        %667 = vmatprep.mubr.bf16.mxu0 0
        %668 = vmatmul.mubr.bf16.gmra.mrb[0].mxu0 %v612
        %v669 = vpop.f32.mrb[0].mxu0
        %v670 = vadd.f32 %v597, %v669
        %v671 = vpop.f32.mrb[0].mxu0
        %v672 = vpop.f32.mrb[0].mxu0
        %v673 = vadd.f32 %v597, %v672
        %v674 = vpop.f32.mrb[0].mxu0
        %675 = vmatprep.mubr.bf16.mxu0 0
        %676 = vmatmul.mubr.bf16.gmra.mrb[0].mxu0 %v615
        %v677 = vpop.f32.mrb[0].mxu0
        %v678 = vadd.f32 %v597, %v677
        %v679 = vpop.f32.mrb[0].mxu0
        %v680 = vpop.f32.mrb[0].mxu0
        %v681 = vadd.f32 %v597, %v680
        %v682 = vpop.f32.mrb[0].mxu0
        %683 = vmatprep.mubr.bf16.mxu0 0
        %684 = vmatmul.mubr.bf16.gmra.mrb[0].mxu0 %v618
        %v685 = vpop.f32.mrb[0].mxu0
        %v686 = vadd.f32 %v597, %v685
        %v687 = vpop.f32.mrb[0].mxu0
        %v688 = vpop.f32.mrb[0].mxu0
        %v689 = vadd.f32 %v597, %v688
        %v690 = vpop.f32.mrb[0].mxu0
        %691 = vmatprep.mubr.bf16.mxu0 0
        %692 = vmatmul.mubr.bf16.gmra.mrb[0].mxu0 %v621
        %v693 = vpop.f32.mrb[0].mxu0
        %v694 = vadd.f32 %v597, %v693
        %v695 = vpop.f32.mrb[0].mxu0
        %v696 = vpop.f32.mrb[0].mxu0
        %v697 = vadd.f32 %v597, %v696
        %v698 = vpop.f32.mrb[0].mxu0
        %699 = vmatprep.mubr.bf16.mxu0 0
        %700 = vmatmul.mubr.bf16.gmra.mrb[0].mxu0 %v624
        %v701 = vpop.f32.mrb[0].mxu0
        %v702 = vadd.f32 %v597, %v701
        %v703 = vpop.f32.mrb[0].mxu0
        %v704 = vpop.f32.mrb[0].mxu0
        %v705 = vadd.f32 %v597, %v704
        %v706 = vpop.f32.mrb[0].mxu0
        %707 = vmatprep.mubr.bf16.mxu0 0
        %708 = vmatmul.mubr.bf16.gmra.mrb[0].mxu0 %v627
        %v709 = vpop.f32.mrb[0].mxu0
        %v710 = vadd.f32 %v597, %v709
        %v711 = vpop.f32.mrb[0].mxu0
        %v712 = vpop.f32.mrb[0].mxu0
        %v713 = vadd.f32 %v597, %v712
        %v714 = vpop.f32.mrb[0].mxu0
        %715 = vmatprep.mubr.bf16.mxu0 0
        %716 = vmatmul.mubr.bf16.gmra.mrb[0].mxu0 %v630
        %v717 = vpop.f32.mrb[0].mxu0
        %v718 = vadd.f32 %v597, %v717
        %v719 = vpop.f32.mrb[0].mxu0
        %v720 = vpop.f32.mrb[0].mxu0
        %v721 = vadd.f32 %v597, %v720
        %v722 = vpop.f32.mrb[0].mxu0
        %723 = vmatprep.mubr.bf16.mxu0 0
        %724 = vmatmul.mubr.bf16.gmra.mrb[0].mxu0 %v633
        %v725 = vpop.f32.mrb[0].mxu0
        %v726 = vadd.f32 %v597, %v725
        %v727 = vpop.f32.mrb[0].mxu0
        %v728 = vpop.f32.mrb[0].mxu0
        %v729 = vadd.f32 %v597, %v728
        %v730 = vpop.f32.mrb[0].mxu0
        %731 = vdwg.mxu0
        %v732 = vmul.f32 %v670, 0.5
        %v733 = vmul.f32 %v673, 0.5
        %v734 = vmul.f32 %v678, 0.5
        %v735 = vmul.f32 %v681, 0.5
        %v736 = vmul.f32 %v686, 0.5
        %v737 = vmul.f32 %v689, 0.5
        %v738 = vmul.f32 %v694, 0.5
        %v739 = vmul.f32 %v697, 0.5
        %v740 = vmul.f32 %v702, 0.5
        %v741 = vmul.f32 %v705, 0.5
        %v742 = vmul.f32 %v710, 0.5
        %v743 = vmul.f32 %v713, 0.5
        %v744 = vmul.f32 %v718, 0.5
        %v745 = vmul.f32 %v721, 0.5
        %v746 = vmul.f32 %v726, 0.5
        %v747 = vmul.f32 %v729, 0.5
        %v748 = vmul.f32 %v670, 0.70710677
        %v749 = vmul.f32 %v673, 0.70710677
        %v750 = vmul.f32 %v678, 0.70710677
        %v751 = vmul.f32 %v681, 0.70710677
        %v752 = vmul.f32 %v686, 0.70710677
        %v753 = vmul.f32 %v689, 0.70710677
        %v754 = vmul.f32 %v694, 0.70710677
        %v755 = vmul.f32 %v697, 0.70710677
        %v756 = vmul.f32 %v702, 0.70710677
        %v757 = vmul.f32 %v705, 0.70710677
        %v758 = vmul.f32 %v710, 0.70710677
        %v759 = vmul.f32 %v713, 0.70710677
        %v760 = vmul.f32 %v718, 0.70710677
        %v761 = vmul.f32 %v721, 0.70710677
        %v762 = vmul.f32 %v726, 0.70710677
        %v763 = vmul.f32 %v729, 0.70710677
        %v764 = verf.f32.pop %v748
        %v765 = verf.f32.pop %v749
        %v766 = verf.f32.pop %v750
        %v767 = verf.f32.pop %v751
        %v768 = verf.f32.pop %v752
        %v769 = verf.f32.pop %v753
        %v770 = verf.f32.pop %v754
        %v771 = verf.f32.pop %v755
        %v772 = verf.f32.pop %v756
        %v773 = verf.f32.pop %v757
        %v774 = verf.f32.pop %v758
        %v775 = verf.f32.pop %v759
        %v776 = verf.f32.pop %v760
        %v777 = verf.f32.pop %v761
        %v778 = verf.f32.pop %v762
        %v779 = verf.f32.pop %v763
        %v780 = vadd.f32 %v764, 1.0
        %v781 = vadd.f32 %v765, 1.0
        %v782 = vadd.f32 %v766, 1.0
        %v783 = vadd.f32 %v767, 1.0
        %v784 = vadd.f32 %v768, 1.0
        %v785 = vadd.f32 %v769, 1.0
        %v786 = vadd.f32 %v770, 1.0
        %v787 = vadd.f32 %v771, 1.0
        %v788 = vadd.f32 %v772, 1.0
        %v789 = vadd.f32 %v773, 1.0
        %v790 = vadd.f32 %v774, 1.0
        %v791 = vadd.f32 %v775, 1.0
        %v792 = vadd.f32 %v776, 1.0
        %v793 = vadd.f32 %v777, 1.0
        %v794 = vadd.f32 %v778, 1.0
        %v795 = vadd.f32 %v779, 1.0
        %v796 = vmul.f32 %v732, %v780
        %v797 = vmul.f32 %v733, %v781
        %v798 = vmul.f32 %v734, %v782
        %v799 = vmul.f32 %v735, %v783
        %v800 = vmul.f32 %v736, %v784
        %v801 = vmul.f32 %v737, %v785
        %v802 = vmul.f32 %v738, %v786
        %v803 = vmul.f32 %v739, %v787
        %v804 = vmul.f32 %v740, %v788
        %v805 = vmul.f32 %v741, %v789
        %v806 = vmul.f32 %v742, %v790
        %v807 = vmul.f32 %v743, %v791
        %v808 = vmul.f32 %v744, %v792
        %v809 = vmul.f32 %v745, %v793
        %v810 = vmul.f32 %v746, %v794
        %v811 = vmul.f32 %v747, %v795
        %v812 = vpack.c.bf16 %v797, %v796
        %v813 = vpack.c.bf16 %v799, %v798
        %v814 = vpack.c.bf16 %v801, %v800
        %v815 = vpack.c.bf16 %v803, %v802
        %v816 = vpack.c.bf16 %v805, %v804
        %v817 = vpack.c.bf16 %v807, %v806
        %v818 = vpack.c.bf16 %v809, %v808
        %v819 = vpack.c.bf16 %v811, %v810
        %v828 = vunpack.c.l.b16 %v812
        %v829 = vunpack.c.h.b16 %v812
        %v830 = vunpack.c.l.b16 %v813
        %v831 = vunpack.c.h.b16 %v813
        %v832 = vunpack.c.l.b16 %v814
        %v833 = vunpack.c.h.b16 %v814
        %v834 = vunpack.c.l.b16 %v815
        %v835 = vunpack.c.h.b16 %v815
        %v836 = vunpack.c.l.b16 %v816
        %v837 = vunpack.c.h.b16 %v816
        %v838 = vunpack.c.l.b16 %v817
        %v839 = vunpack.c.h.b16 %v817
        %v840 = vunpack.c.l.b16 %v818
        %v841 = vunpack.c.h.b16 %v818
        %v842 = vunpack.c.l.b16 %v819
        %v843 = vunpack.c.h.b16 %v819
        %v844 = vpack.c.b16 %v828, %v828
        %v845 = vpack.c.b16 %v829, %v829
        %v846 = vpack.c.b16 %v830, %v830
        %v847 = vpack.c.b16 %v831, %v831
        %v848 = vpack.c.b16 %v832, %v832
        %v849 = vpack.c.b16 %v833, %v833
        %v850 = vpack.c.b16 %v834, %v834
        %v851 = vpack.c.b16 %v835, %v835
        %v852 = vpack.c.b16 %v836, %v836
        %v853 = vpack.c.b16 %v837, %v837
        %v854 = vpack.c.b16 %v838, %v838
        %v855 = vpack.c.b16 %v839, %v839
        %v856 = vpack.c.b16 %v840, %v840
        %v857 = vpack.c.b16 %v841, %v841
        %v858 = vpack.c.b16 %v842, %v842
        %v859 = vpack.c.b16 %v843, %v843
        %vm876 = vcmask 125952
        %877 = vst.msk [vmem:[%s299] sm:$0xf] %vm876, %v844
        %878 = vst.msk [vmem:[%s299 + $0x4] sm:$0xf] %vm876, %v845
        %879 = vst.msk [vmem:[%s299 + $0x8] sm:$0xf] %vm876, %v846
        %880 = vst.msk [vmem:[%s299 + $0xc] sm:$0xf] %vm876, %v847
        %881 = vst.msk [vmem:[%s299 + $0x10] sm:$0xf] %vm876, %v848
        %882 = vst.msk [vmem:[%s299 + $0x14] sm:$0xf] %vm876, %v849
        %883 = vst.msk [vmem:[%s299 + $0x18] sm:$0xf] %vm876, %v850
        %884 = vst.msk [vmem:[%s299 + $0x1c] sm:$0xf] %vm876, %v851
        %885 = vst.msk [vmem:[%s299 + $0x20] sm:$0xf] %vm876, %v852
        %886 = vst.msk [vmem:[%s299 + $0x24] sm:$0xf] %vm876, %v853
        %887 = vst.msk [vmem:[%s299 + $0x28] sm:$0xf] %vm876, %v854
        %888 = vst.msk [vmem:[%s299 + $0x2c] sm:$0xf] %vm876, %v855
        %889 = vst.msk [vmem:[%s299 + $0x30] sm:$0xf] %vm876, %v856
        %890 = vst.msk [vmem:[%s299 + $0x34] sm:$0xf] %vm876, %v857
        %891 = vst.msk [vmem:[%s299 + $0x38] sm:$0xf] %vm876, %v858
        %892 = vst.msk [vmem:[%s299 + $0x3c] sm:$0xf] %vm876, %v859
        %v893 = vlaneseq
        %v894 = vshrl.u32 %v893, 7
        %v895 = vadd.s32 %v894, 8
        %v896 = vadd.s32 %v894, 16
        %v897 = vadd.s32 %v894, 24
        %v898 = vadd.s32 %v894, 32
        %v899 = vadd.s32 %v894, 40
        %v900 = vadd.s32 %v894, 48
        %v901 = vadd.s32 %v894, 56
        %v902 = vadd.s32 %v894, 64
        %v903 = vadd.s32 %v894, 72
        %v904 = vadd.s32 %v894, 80
        %v905 = vadd.s32 %v894, 88
        %v906 = vadd.s32 %v894, 96
        %v907 = vadd.s32 %v894, 104
        %v908 = vadd.s32 %v894, 112
        %v909 = vadd.s32 %v894, 120
        %s910 = smul.u32 %s26, 128
        %v911 = vstv %s910
        %v912 = vadd.s32 %v894, %v911
        %v913 = vadd.s32 %v895, %v911
        %v914 = vadd.s32 %v896, %v911
        %v915 = vadd.s32 %v897, %v911
        %v916 = vadd.s32 %v898, %v911
        %v917 = vadd.s32 %v899, %v911
        %v918 = vadd.s32 %v900, %v911
        %v919 = vadd.s32 %v901, %v911
        %v920 = vadd.s32 %v902, %v911
        %v921 = vadd.s32 %v903, %v911
        %v922 = vadd.s32 %v904, %v911
        %v923 = vadd.s32 %v905, %v911
        %v924 = vadd.s32 %v906, %v911
        %v925 = vadd.s32 %v907, %v911
        %v926 = vadd.s32 %v908, %v911
        %v927 = vadd.s32 %v909, %v911
        %vm928 = vcmp.lt.s32.totalorder %v912, 8
        %vm929 = vcmp.lt.s32.totalorder %v913, 8
        %vm930 = vcmp.lt.s32.totalorder %v914, 8
        %vm931 = vcmp.lt.s32.totalorder %v915, 8
        %vm932 = vcmp.lt.s32.totalorder %v916, 8
        %vm933 = vcmp.lt.s32.totalorder %v917, 8
        %vm934 = vcmp.lt.s32.totalorder %v918, 8
        %vm935 = vcmp.lt.s32.totalorder %v919, 8
        %vm936 = vcmp.lt.s32.totalorder %v920, 8
        %vm937 = vcmp.lt.s32.totalorder %v921, 8
        %vm938 = vcmp.lt.s32.totalorder %v922, 8
        %vm939 = vcmp.lt.s32.totalorder %v923, 8
        %vm940 = vcmp.lt.s32.totalorder %v924, 8
        %vm941 = vcmp.lt.s32.totalorder %v925, 8
        %vm942 = vcmp.lt.s32.totalorder %v926, 8
        %vm943 = vcmp.lt.s32.totalorder %v927, 8
        %v944 = vsel %vm928, 1, 0
        %v945 = vsel %vm929, 1, 0
        %v946 = vsel %vm930, 1, 0
        %v947 = vsel %vm931, 1, 0
        %v948 = vsel %vm932, 1, 0
        %v949 = vsel %vm933, 1, 0
        %v950 = vsel %vm934, 1, 0
        %v951 = vsel %vm935, 1, 0
        %v952 = vsel %vm936, 1, 0
        %v953 = vsel %vm937, 1, 0
        %v954 = vsel %vm938, 1, 0
        %v955 = vsel %vm939, 1, 0
        %v956 = vsel %vm940, 1, 0
        %v957 = vsel %vm941, 1, 0
        %v958 = vsel %vm942, 1, 0
        %v959 = vsel %vm943, 1, 0
        %vm960 = vcmp.eq.s32.totalorder %v944, 1
        %vm961 = vcmp.eq.s32.totalorder %v945, 1
        %vm962 = vcmp.eq.s32.totalorder %v946, 1
        %vm963 = vcmp.eq.s32.totalorder %v947, 1
        %vm964 = vcmp.eq.s32.totalorder %v948, 1
        %vm965 = vcmp.eq.s32.totalorder %v949, 1
        %vm966 = vcmp.eq.s32.totalorder %v950, 1
        %vm967 = vcmp.eq.s32.totalorder %v951, 1
        %vm968 = vcmp.eq.s32.totalorder %v952, 1
        %vm969 = vcmp.eq.s32.totalorder %v953, 1
        %vm970 = vcmp.eq.s32.totalorder %v954, 1
        %vm971 = vcmp.eq.s32.totalorder %v955, 1
        %vm972 = vcmp.eq.s32.totalorder %v956, 1
        %vm973 = vcmp.eq.s32.totalorder %v957, 1
        %vm974 = vcmp.eq.s32.totalorder %v958, 1
        %vm975 = vcmp.eq.s32.totalorder %v959, 1
        %v976 = vsel %vm960, %v796, 0.0
        %v977 = vsel %vm961, %v797, 0.0
        %v978 = vsel %vm962, %v798, 0.0
        %v979 = vsel %vm963, %v799, 0.0
        %v980 = vsel %vm964, %v800, 0.0
        %v981 = vsel %vm965, %v801, 0.0
        %v982 = vsel %vm966, %v802, 0.0
        %v983 = vsel %vm967, %v803, 0.0
        %v984 = vsel %vm968, %v804, 0.0
        %v985 = vsel %vm969, %v805, 0.0
        %v986 = vsel %vm970, %v806, 0.0
        %v987 = vsel %vm971, %v807, 0.0
        %v988 = vsel %vm972, %v808, 0.0
        %v989 = vsel %vm973, %v809, 0.0
        %v990 = vsel %vm974, %v810, 0.0
        %v991 = vsel %vm975, %v811, 0.0
        %v992 = vld [vmem:[%s280] sm:$0x1]
        %vm993 = vcmask 261248
        %v994 = vsel %vm993, %v976, 0.0
        %v995 = vsel %vm993, %v977, 0.0
        %v996 = vadd.f32 %v994, %v995
        %v997 = vsel %vm993, %v978, 0.0
        %v998 = vadd.f32 %v996, %v997
        %v999 = vsel %vm993, %v979, 0.0
        %v1000 = vadd.f32 %v998, %v999
        %v1001 = vsel %vm993, %v980, 0.0
        %v1002 = vadd.f32 %v1000, %v1001
        %v1003 = vsel %vm993, %v981, 0.0
        %v1004 = vadd.f32 %v1002, %v1003
        %v1005 = vsel %vm993, %v982, 0.0
        %v1006 = vadd.f32 %v1004, %v1005
        %v1007 = vsel %vm993, %v983, 0.0
        %v1008 = vadd.f32 %v1006, %v1007
        %v1009 = vsel %vm993, %v984, 0.0
        %v1010 = vadd.f32 %v1008, %v1009
        %v1011 = vsel %vm993, %v985, 0.0
        %v1012 = vadd.f32 %v1010, %v1011
        %v1013 = vsel %vm993, %v986, 0.0
        %v1014 = vadd.f32 %v1012, %v1013
        %v1015 = vsel %vm993, %v987, 0.0
        %v1016 = vadd.f32 %v1014, %v1015
        %v1017 = vsel %vm993, %v988, 0.0
        %v1018 = vadd.f32 %v1016, %v1017
        %v1019 = vsel %vm993, %v989, 0.0
        %v1020 = vadd.f32 %v1018, %v1019
        %v1021 = vsel %vm993, %v990, 0.0
        %v1022 = vadd.f32 %v1020, %v1021
        %v1023 = vsel %vm993, %v991, 0.0
        %v1024 = vadd.f32 %v1022, %v1023
        %v1025 = vrot.slane %v1024, 4
        %v1026 = vadd.f32 %v1024, %v1025
        %v1027 = vrot.slane %v1026, 2
        %v1028 = vadd.f32 %v1026, %v1027
        %v1029 = vrot.slane %v1028, 1
        %v1030 = vadd.f32 %v1028, %v1029
        %v1033 = vunpack.c.l.s4 1966171168
        %v1034 = vunpack.c.0.s8 %v1033
        %v1035 = vlaneseq
        %v1036 = vshrl.u32 %v1035, 7
        %v1037 = vsub.s32 %v1034, %v1036
        %v1038 = vrot.slane %v1030, %v1037
        %v1040 = vunpack.c.l.s4 1966171168
        %v1041 = vunpack.c.0.s8 %v1040
        %v1042 = vlaneseq
        %v1043 = vshrl.u32 %v1042, 7
        %v1044 = vsub.s32 %v1041, %v1043
        %v1045 = vrot.slane %v1038, %v1044
        %1046 = vrot.lane.b32.xlu0 %v1045, 112
        %v1047 = vpop.permute.xlu0 %1046
        %v1049 = vadd.f32 %v992, %v1047
        %vm1050 = vcmask 122880
        %1051 = vst.msk [vmem:[%s280] sm:$0x1] %vm1050, %v1049
        %s1052 = smul.u32 16, %s26
        %p1053 = scmp.lt.s32.totalorder %s25, 1
        %s1054 = scalar_select %p1053, %s25, 1
        %p1055 = scmp.lt.s32.totalorder %s1052, 15
        %s1056 = scalar_select %p1055, %s1052, 15
        %s1057 = smul.addr %s1054, 16
        %s1058 = sadd.s32 %s1056, %s1057
        %s1059 = smul.addr %s1058, 4
        %s1060 = scalar_lea.vmem %s5, %s1059
        %s1061 = sand.u32 %s181, 1
        %s1062 = scalar_lea.sflag [#allocation3], %s1061
        %s1063 = sand.u32 %s181, 1
        %s1064 = scalar_lea.vmem [#allocation2], %s1063
        // Predicated region
        $region45: #{tpu_custom_call.1} parent=39 // pred_check
          %p1065 = pneg %p165
        $region46: #{tpu_custom_call.1} parent=39 // pred_check_branch
          %1067 = sbr.rel (%p1065) target = $region48
        $region47: #{tpu_custom_call.1} parent=39 // pred_region
          %s1068 = smul.u32 16, %s26
        $region48: #{tpu_custom_call.1} parent=39 // pred_fallthru
          _
        // Predicated region
        $region49: #{tpu_custom_call.1} parent=39 // pred_check
          %p1069 = pneg %p191
        $region50: #{tpu_custom_call.1} parent=39 // pred_check_branch
          %1071 = sbr.rel (%p1069) target = $region52
        $region51: #{tpu_custom_call.1} parent=39 // pred_region
          %s1073 = ssub.s32 16, 16
          %1074 = vsyncadd %s1062, %s1073
          %s1075 = smul.addr %s25, 16
          %s1076 = scalar_lea.hbm %s6, %s1075
          %s1078 = sshll.u32 %s1064, 4
          %s1079 = int_to_ptr.vmem [resolvable:$true] %s1078
          %1081 = dma.vmem_to_hbm [thread:$0]  %s1079, 16, %s1076, %s1062
        $region52: #{tpu_custom_call.1} parent=39 // pred_fallthru
          _
      $region40: #{tpu_custom_call.1} parent=5 // pred_fallthru
        _
      %p1082 = scmp.le.s32.totalorder 2, %s16
      // Predicated region
      $region53: #{tpu_custom_call.1} parent=5 // pred_check
        %p1083 = pneg %p1082
      $region54: #{tpu_custom_call.1} parent=5 // pred_check_branch
        %1085 = sbr.rel (%p1083) target = $region56
      $region55: #{tpu_custom_call.1} parent=5 // pred_region
        %s1086 = ssub.s32 %s16, 2
        // Predicated region
        $region57: #{tpu_custom_call.1} parent=55 // pred_check
          %p1087 = pneg %p171
        $region58: #{tpu_custom_call.1} parent=55 // pred_check_branch
          %1089 = sbr.rel (%p1087) target = $region60
        $region59: #{tpu_custom_call.1} parent=55 // pred_region
          %s1090 = smul.u32 16, %s28
          %p1091 = scmp.lt.s32.totalorder %s27, 1
          %s1092 = scalar_select %p1091, %s27, 1
          %p1093 = scmp.lt.s32.totalorder %s1090, 15
          %s1094 = scalar_select %p1093, %s1090, 15
          %s1095 = smul.addr %s1092, 16
          %s1096 = sadd.s32 %s1094, %s1095
          %s1097 = smul.addr %s1096, 4
          %s1098 = scalar_lea.vmem %s5, %s1097
        $region60: #{tpu_custom_call.1} parent=55 // pred_fallthru
          _
        // Predicated region
        $region61: #{tpu_custom_call.1} parent=55 // pred_check
          %p1099 = pneg %p197
        $region62: #{tpu_custom_call.1} parent=55 // pred_check_branch
          %1101 = sbr.rel (%p1099) target = $region64
        $region63: #{tpu_custom_call.1} parent=55 // pred_region
          %s1102 = sand.u32 %s182, 1
          %s1103 = scalar_lea.sflag [#allocation3], %s1102
          %s1104 = sand.u32 %s182, 1
          %s1105 = scalar_lea.vmem [#allocation2], %s1104
          %1106 = dma.done %s1103, 16
        $region64: #{tpu_custom_call.1} parent=55 // pred_fallthru
          _
      $region56: #{tpu_custom_call.1} parent=5 // pred_fallthru
        _
    $region6: #{tpu_custom_call.1} parent=1 // loop_footer
      %s20 = sadd.s32 1, %s16
    $region7: #{tpu_custom_call.1} parent=1 // loop_footer_branch
      %15 = sbr.rel target = $region3
    $region8: #{tpu_custom_call.1} parent=1 // loop_exit
      _
    %1107 = vsyncpa [#allocation3], 1
    %s1108 = scalar_lea.sflag [#allocation3], 1
    %1109 = vsyncpa %s1108, 1

</llo_original>
